<compile_context>
chip_gen: v6e
topology: v6e:2x2x1
jax: 0.10.0
libtpu: 0.0.40
codegen_flags: <defaults>
</compile_context>

<pallas_src>
import functools

import jax
import jax.numpy as jnp
from jax import lax
from jax.experimental import pallas as pl
from jax.experimental.pallas import tpu as pltpu

_SUBLANE = 8


def _round_up(n, m):
    return ((n + m - 1) // m) * m


def _pad_axis(a, axis, new_size):
    if a.shape[axis] == new_size:
        return a
    pad = [(0, 0)] * a.ndim
    pad[axis] = (0, new_size - a.shape[axis])
    return jnp.pad(a, pad)


# ------------------- single-step cell (exact module forward) -------------------

def _indrnn_cell_kernel(x_ref, h_ref, w_ref, ub_ref, o_ref):
    u = ub_ref[0:1, :].astype(jnp.float32)          # (1, recdim) -> broadcasts over batch
    b = ub_ref[1:2, :].astype(jnp.float32)
    xw = jnp.dot(x_ref[...], w_ref[...], preferred_element_type=jnp.float32)  # MXU
    pre = h_ref[...].astype(jnp.float32) * u + xw + b                          # VPU
    o_ref[...] = jnp.tanh(pre).astype(o_ref.dtype)                             # EUP


def indrnn_cell(x_t, h_tm1, w, u, b):
    """h_t = tanh(h_tm1 * u + x_t @ w + b), single step in one pallas_call."""
    batch, inpdim = x_t.shape
    recdim = w.shape[1]
    batch_p = _round_up(batch, _SUBLANE)

    # Only batch is (conditionally) padded; inpdim/recdim blocks equal the full
    # array dims so no lane padding / extra HBM traffic is needed.
    x_p = _pad_axis(x_t, 0, batch_p)
    h_p = _pad_axis(h_tm1, 0, batch_p)
    ub = jnp.stack([u, b])                           # (2, recdim): one tiny operand / DMA

    out = pl.pallas_call(
        _indrnn_cell_kernel,
        out_shape=jax.ShapeDtypeStruct((batch_p, recdim), x_t.dtype),
    )(x_p, h_p, w, ub)
    return out if batch_p == batch else out[:batch]


# ------------------- phase 1: XW + b precompute (one big MXU matmul) -------------------

def _xw_plus_b_kernel(x_ref, w_ref, b_ref, o_ref):
    o_ref[...] = (
        jnp.dot(x_ref[...], w_ref[...], preferred_element_type=jnp.float32)
        + b_ref[...].astype(jnp.float32)
    )


# ------------------- phase 2: serial recurrence (VPU/EUP only) -------------------

def _indrnn_recurrence_kernel(xwb_ref, h0_ref, u_ref, o_ref, h_acc, *, tb):
    # New batch tile (time block index == 0): (re)load the initial state.
    @pl.when(pl.program_id(1) == 0)
    def _():
        h_acc[...] = h0_ref[...].astype(jnp.float32)

    b_tile, recdim = h_acc.shape
    # Hoist + materialize the u broadcast once (not once per unrolled step:
    # JAX does not CSE broadcast_in_dim).
    u_b = jnp.broadcast_to(u_ref[...].astype(jnp.float32), (b_tile, recdim))

    def step(i, h):
        h_new = jnp.tanh(h * u_b + xwb_ref[i])       # VPU mul/add + EUP tanh; no MXU
        o_ref[i] = h_new.astype(o_ref.dtype)
        return h_new

    h_acc[...] = lax.fori_loop(0, tb, step, h_acc[...], unroll=True)


def indrnn_sequence(x_seq, h0, w, u, b, *, time_block=16, batch_tile=None):
    """Apply the IndRNN cell over a whole sequence.

    x_seq: (T, batch, inpdim) -> (T, batch, recdim) of hidden states h_1..h_T.
    """
    T, batch, inpdim = x_seq.shape
    recdim = w.shape[1]

    tb = max(1, min(time_block, T))                  # time steps per grid iteration
    t_p = _round_up(T, tb)
    if batch_tile is None:
        batch_tile = _round_up(batch, _SUBLANE)      # toy sizes: single batch tile
    batch_tile = _round_up(batch_tile, _SUBLANE)
    batch_p = _round_up(batch, batch_tile)

    x_p = _pad_axis(_pad_axis(x_seq, 0, t_p), 1, batch_p)   # zero padding is exact
    h0_p = _pad_axis(h0, 0, batch_p)

    n_t = t_p // tb
    n_b = batch_p // batch_tile

    # ---- Phase 1: XW + b over all T*batch rows in one parallel-grid matmul. ----
    rows = t_p * batch_p
    m_tile = tb * batch_p                            # always divides rows; fills MXU rows
    x2d = x_p.reshape(rows, inpdim)                  # leading-dim collapse: free reshape
    b_row = b.reshape(1, recdim)

    xwb2d = pl.pallas_call(
        _xw_plus_b_kernel,
        out_shape=jax.ShapeDtypeStruct((rows, recdim), jnp.float32),
        grid=(rows // m_tile,),
        in_specs=[
            pl.BlockSpec((m_tile, inpdim), lambda i: (i, 0)),
            pl.BlockSpec((inpdim, recdim), lambda i: (0, 0)),   # w resident
            pl.BlockSpec((1, recdim), lambda i: (0, 0)),        # b resident
        ],
        out_specs=pl.BlockSpec((m_tile, recdim), lambda i: (i, 0)),
        compiler_params=pltpu.CompilerParams(
            dimension_semantics=("parallel",),
            vmem_limit_bytes=32 * 1024 * 1024,
        ),
    )(x2d, w, b_row)
    xwb = xwb2d.reshape(t_p, batch_p, recdim)        # free leading-dim split

    # ---- Phase 2: recurrence. batch tiles parallel (v7x 2 TCs), time arbitrary. ----
    u_row = u.reshape(1, recdim)
    out = pl.pallas_call(
        functools.partial(_indrnn_recurrence_kernel, tb=tb),
        out_shape=jax.ShapeDtypeStruct((t_p, batch_p, recdim), x_seq.dtype),
        grid=(n_b, n_t),
        in_specs=[
            pl.BlockSpec((tb, batch_tile, recdim), lambda bi, ti: (ti, bi, 0)),
            pl.BlockSpec((batch_tile, recdim), lambda bi, ti: (bi, 0)),   # h0 tile
            pl.BlockSpec((1, recdim), lambda bi, ti: (0, 0)),             # u resident
        ],
        out_specs=pl.BlockSpec((tb, batch_tile, recdim), lambda bi, ti: (ti, bi, 0)),
        scratch_shapes=[pltpu.VMEM((batch_tile, recdim), jnp.float32)],
        compiler_params=pltpu.CompilerParams(
            dimension_semantics=("parallel", "arbitrary"),   # time is the serial axis
            vmem_limit_bytes=32 * 1024 * 1024,
        ),
    )(xwb, h0_p, u_row)

    if t_p != T or batch_p != batch:
        out = out[:T, :batch]
    return out


if __name__ == "__main__":
    key = jax.random.PRNGKey(0)
    k_x, k_h, k_w, k_u, k_b = jax.random.split(key, 5)

    T, batch, inpdim, recdim = 8, 8, 16, 32

    # Deterministic synthetic parameters (torch.randn analog).
    w = jax.random.normal(k_w, (inpdim, recdim), dtype=jnp.float32)
    u = jax.random.normal(k_u, (recdim,), dtype=jnp.float32)
    b = jax.random.normal(k_b, (recdim,), dtype=jnp.float32)
    # TODO(synk): self.F (nn.Linear(recdim, 1)) is unused in forward(); not materialized.

    x_seq = jax.random.normal(k_x, (T, batch, inpdim), dtype=jnp.float32)
    h0 = jax.random.normal(k_h, (batch, recdim), dtype=jnp.float32)

    # --- single-step cell (exact module forward) ---
    h1 = indrnn_cell(x_seq[0], h0, w, u, b)
    jax.block_until_ready(h1)
    ref1 = jnp.tanh(h0 * u + x_seq[0] @ w + b)
    assert h1.shape == (batch, recdim)
    assert jnp.allclose(h1, ref1, atol=1e-5, rtol=1e-5)

    # --- fused full-sequence kernels (XW precompute + recurrence) ---
    hs = indrnn_sequence(x_seq, h0, w, u, b)
    jax.block_until_ready(hs)

    def ref_step(h, xt):
        h_new = jnp.tanh(h * u + xt @ w + b)
        return h_new, h_new

    _, ref_seq = jax.lax.scan(ref_step, h0, x_seq)
    assert hs.shape == (T, batch, recdim)
    assert jnp.allclose(hs, ref_seq, atol=1e-4, rtol=1e-4)

    print("KERNEL_OK")
</pallas_src>

<mosaic_0001>
module attributes {stable_mosaic.version = 11 : i64} {
  func.func @_indrnn_cell_kernel(%arg0: memref<8x16xf32, #tpu.memory_space<vmem>>, %arg1: memref<8x32xf32, #tpu.memory_space<vmem>>, %arg2: memref<16x32xf32, #tpu.memory_space<vmem>>, %arg3: memref<2x32xf32, #tpu.memory_space<vmem>>, %arg4: memref<8x32xf32, #tpu.memory_space<vmem>>) attributes {dimension_semantics = [], scalar_prefetch = 0 : i64, scratch_operands = 0 : i64, tpu.core_type = #tpu.core_type<tc>} {
    %c0 = arith.constant 0 : index
    %c0_0 = arith.constant 0 : index
    %0 = vector.load %arg3[%c0, %c0_0] : memref<2x32xf32, #tpu.memory_space<vmem>>, vector<1x32xf32>
    %c1 = arith.constant 1 : index
    %c0_1 = arith.constant 0 : index
    %1 = vector.load %arg3[%c1, %c0_1] : memref<2x32xf32, #tpu.memory_space<vmem>>, vector<1x32xf32>
    %c0_2 = arith.constant 0 : index
    %c0_3 = arith.constant 0 : index
    %2 = vector.load %arg0[%c0_2, %c0_3] : memref<8x16xf32, #tpu.memory_space<vmem>>, vector<8x16xf32>
    %c0_4 = arith.constant 0 : index
    %c0_5 = arith.constant 0 : index
    %3 = vector.load %arg2[%c0_4, %c0_5] : memref<16x32xf32, #tpu.memory_space<vmem>>, vector<16x32xf32>
    %cst = arith.constant dense<0.000000e+00> : vector<8x32xf32>
    %4 = tpu.matmul %2, %3, %cst {dimension_numbers = #tpu.dot_dimension_numbers<[1], [0], [0], [1], [0, 0, 1, 1], [], []>} : vector<8x16xf32>, vector<16x32xf32>, vector<8x32xf32> -> vector<8x32xf32>
    %c0_6 = arith.constant 0 : index
    %c0_7 = arith.constant 0 : index
    %5 = vector.load %arg1[%c0_6, %c0_7] : memref<8x32xf32, #tpu.memory_space<vmem>>, vector<8x32xf32>
    %6 = vector.broadcast %0 : vector<1x32xf32> to vector<8x32xf32>
    %7 = arith.mulf %5, %6 : vector<8x32xf32>
    %8 = arith.addf %7, %4 : vector<8x32xf32>
    %9 = vector.broadcast %1 : vector<1x32xf32> to vector<8x32xf32>
    %10 = arith.addf %8, %9 : vector<8x32xf32>
    %11 = math.tanh %10 : vector<8x32xf32>
    %c0_8 = arith.constant 0 : index
    %c0_9 = arith.constant 0 : index
    %12 = vector.load %arg4[%c0_8, %c0_9] : memref<8x32xf32, #tpu.memory_space<vmem>>, vector<8x32xf32>
    tpu.vector_store %arg4[%c0_8, %c0_9], %11 {strides = array<i32>} : memref<8x32xf32, #tpu.memory_space<vmem>>, vector<8x32xf32>,
    return
  }
}

</mosaic_0001>

<llo_original>
// kernel: tpu_custom_call.1
$region0: #{tpu_custom_call.1}
  #allocation0 [shape = 'u32[]', space=smem, size = 0x4, offset = 0x4, fixed_abs, tag = 'smem constant byte address 0x4 - core index']
  #allocation1 [shape = 'u32[144,128]{1,0:T(1,128)}', space=vmem, size = 0x12000, scoped, tag = 'internal scratch']
  %s0 = inlined_call_operand.hbm [shape: f32[8,16], index: 0, kind: input, shape index: {}]
  %s1 = inlined_call_operand.hbm [shape: f32[8,32], index: 1, kind: input, shape index: {}]
  %s2 = inlined_call_operand.hbm [shape: f32[16,32], index: 2, kind: input, shape index: {}]
  %s3 = inlined_call_operand.vmem [shape: f32[2,32], index: 3, kind: input, shape index: {}]
  %s4 = inlined_call_operand.hbm [shape: f32[8,32], index: 4, kind: output, shape index: {}]
  %s5 = sld [smem:[#allocation0]]
  $region38: #{tpu_custom_call.1} parent=0
    _
  %s7 = ssub.s32 1, %s5
  %s8 = scalar_select 0, %s7, %s5
  $region1: #{tpu_custom_call.1} parent=0
    #allocation2 [shape = 'u8[4096]{0}', space=vmem, size = 0x1000, scoped, tag = 'input window, operand 0, single buffered']
    #allocation3 [shape = 's32[1]{0}', space=sflag, size = 0x4, scoped, tag = 'scoped memory for tpu_custom_call.1']
    #allocation4 [shape = 's32[1]{0}', space=sflag, size = 0x4, scoped, tag = 'scoped memory for tpu_custom_call.1']
    #allocation5 [shape = 'u8[4096]{0}', space=vmem, size = 0x1000, scoped, tag = 'input window, operand 1, single buffered']
    #allocation6 [shape = 's32[1]{0}', space=sflag, size = 0x4, scoped, tag = 'scoped memory for tpu_custom_call.1']
    #allocation7 [shape = 'u8[8192]{0}', space=vmem, size = 0x2000, scoped, tag = 'input window, operand 2, single buffered']
    #allocation8 [shape = 'u8[4096]{0}', space=vmem, size = 0x1000, scoped, tag = 'output window, operand 0, single buffered']
    %9 = vsyncpa [#allocation3], 0
    %10 = vsyncpa [#allocation6], 0
    %11 = vsyncpa [#allocation4], 0
    // Predicated region
    $region2: #{tpu_custom_call.1} parent=1 // pred_check
      _
    $region3: #{tpu_custom_call.1} parent=1 // pred_check_branch
      %13 = sbr.rel (0) target = $region5
    $region4: #{tpu_custom_call.1} parent=1 // pred_region
      %s15 = ssub.s32 128, 128
      %16 = vsyncadd [#allocation3], %s15
      %s18 = sshll.u32 [#allocation2], 4
      %s19 = int_to_ptr.vmem [resolvable:$true] %s18
      %21 = dma.hbm_to_vmem [thread:$0]  %s0, 128, %s19, [#allocation3]
    $region5: #{tpu_custom_call.1} parent=1 // pred_fallthru
      _
    // Predicated region
    $region6: #{tpu_custom_call.1} parent=1 // pred_check
      _
    $region7: #{tpu_custom_call.1} parent=1 // pred_check_branch
      %23 = sbr.rel (0) target = $region9
    $region8: #{tpu_custom_call.1} parent=1 // pred_region
      %s25 = ssub.s32 128, 128
      %26 = vsyncadd [#allocation6], %s25
      %s28 = sshll.u32 [#allocation5], 4
      %s29 = int_to_ptr.vmem [resolvable:$true] %s28
      %31 = dma.hbm_to_vmem [thread:$0]  %s1, 128, %s29, [#allocation6]
    $region9: #{tpu_custom_call.1} parent=1 // pred_fallthru
      _
    // Predicated region
    $region10: #{tpu_custom_call.1} parent=1 // pred_check
      _
    $region11: #{tpu_custom_call.1} parent=1 // pred_check_branch
      %33 = sbr.rel (0) target = $region13
    $region12: #{tpu_custom_call.1} parent=1 // pred_region
      %s35 = ssub.s32 256, 256
      %36 = vsyncadd [#allocation6], %s35
      %s37 = sshll.u32 [#allocation7], 4
      %s38 = int_to_ptr.vmem [resolvable:$true] %s37
      %43 = dma.hbm_to_vmem [thread:$0]  %s2, 256, %s38, [#allocation6], 128, 128, 8
    $region13: #{tpu_custom_call.1} parent=1 // pred_fallthru
      _
    // Predicated region
    $region14: #{tpu_custom_call.1} parent=1 // pred_check
      _
    $region15: #{tpu_custom_call.1} parent=1 // pred_check_branch
      %45 = sbr.rel (0) target = $region17
    $region16: #{tpu_custom_call.1} parent=1 // pred_region
      _
    $region17: #{tpu_custom_call.1} parent=1 // pred_fallthru
      _
    // Predicated region
    $region18: #{tpu_custom_call.1} parent=1 // pred_check
      _
    $region19: #{tpu_custom_call.1} parent=1 // pred_check_branch
      %47 = sbr.rel (0) target = $region21
    $region20: #{tpu_custom_call.1} parent=1 // pred_region
      %48 = dma.done [#allocation3], 128
    $region21: #{tpu_custom_call.1} parent=1 // pred_fallthru
      _
    // Predicated region
    $region22: #{tpu_custom_call.1} parent=1 // pred_check
      _
    $region23: #{tpu_custom_call.1} parent=1 // pred_check_branch
      %50 = sbr.rel (0) target = $region25
    $region24: #{tpu_custom_call.1} parent=1 // pred_region
      %51 = dma.done [#allocation6], 128
    $region25: #{tpu_custom_call.1} parent=1 // pred_fallthru
      _
    // Predicated region
    $region26: #{tpu_custom_call.1} parent=1 // pred_check
      _
    $region27: #{tpu_custom_call.1} parent=1 // pred_check_branch
      %53 = sbr.rel (0) target = $region29
    $region28: #{tpu_custom_call.1} parent=1 // pred_region
      %54 = dma.done [#allocation6], 256
    $region29: #{tpu_custom_call.1} parent=1 // pred_fallthru
      _
    %v55 = vld [vmem:[%s3] sm:$0x1]
    %v56 = vld [vmem:[%s3 + $0x1] sm:$0x1]
    %v57 = vld [vmem:[#allocation2] sm:$0xff]
    %v58 = vld [vmem:[#allocation7] sm:$0xff]
    %v59 = vld [vmem:[#allocation7 + $0x8] sm:$0xff]
    %vm60 = vcmask 130048
    %v62 = vsel %vm60, %v57, 0
    %64 = vmatprep.subr.mxu0 0.0
    %65 = vmatpush1.msra.mxu0 0.0
    %66 = vmatprep.subr.mxu0 0.0
    %67 = vmatpush1.msra.mxu0 0.0
    %68 = vmatprep.subr.mxu0 0.0
    %69 = vmatpush1.msra.mxu0 0.0
    %70 = vmatprep.subr.mxu0 0.0
    %71 = vmatpush1.msra.mxu0 0.0
    %72 = vmatprep.subr.mxu0 0.0
    %73 = vmatpush1.msra.mxu0 0.0
    %74 = vmatprep.subr.mxu0 0.0
    %75 = vmatpush1.msra.mxu0 0.0
    %76 = vmatprep.subr.mxu0 0.0
    %77 = vmatpush1.msra.mxu0 0.0
    %78 = vmatprep.subr.mxu0 0.0
    %79 = vmatpush1.msra.mxu0 0.0
    %80 = vmatprep.subr.mxu0 0.0
    %81 = vmatpush1.msra.mxu0 0.0
    %82 = vmatprep.subr.mxu0 0.0
    %83 = vmatpush1.msra.mxu0 0.0
    %84 = vmatprep.subr.mxu0 0.0
    %85 = vmatpush1.msra.mxu0 0.0
    %86 = vmatprep.subr.mxu0 0.0
    %87 = vmatpush1.msra.mxu0 0.0
    %88 = vmatprep.subr.mxu0 0.0
    %89 = vmatpush1.msra.mxu0 0.0
    %90 = vmatprep.subr.mxu0 0.0
    %91 = vmatpush1.msra.mxu0 0.0
    %92 = vmatprep.subr.mxu0 0.0
    %93 = vmatpush1.msra.mxu0 %v59
    %94 = vmatprep.subr.mxu0 0.0
    %95 = vmatpush1.msra.mxu0 %v58
    %96 = vmatprep.subr.mxu0 0.0
    %97 = vmatpush2.msra.mxu0 0.0
    %98 = vmatprep.subr.mxu0 0.0
    %99 = vmatpush2.msra.mxu0 0.0
    %100 = vmatprep.subr.mxu0 0.0
    %101 = vmatpush2.msra.mxu0 0.0
    %102 = vmatprep.subr.mxu0 0.0
    %103 = vmatpush2.msra.mxu0 0.0
    %104 = vmatprep.subr.mxu0 0.0
    %105 = vmatpush2.msra.mxu0 0.0
    %106 = vmatprep.subr.mxu0 0.0
    %107 = vmatpush2.msra.mxu0 0.0
    %108 = vmatprep.subr.mxu0 0.0
    %109 = vmatpush2.msra.mxu0 0.0
    %110 = vmatprep.subr.mxu0 0.0
    %111 = vmatpush2.msra.mxu0 0.0
    %112 = vmatprep.subr.mxu0 0.0
    %113 = vmatpush2.msra.mxu0 0.0
    %114 = vmatprep.subr.mxu0 0.0
    %115 = vmatpush2.msra.mxu0 0.0
    %116 = vmatprep.subr.mxu0 0.0
    %117 = vmatpush2.msra.mxu0 0.0
    %118 = vmatprep.subr.mxu0 0.0
    %119 = vmatpush2.msra.mxu0 0.0
    %120 = vmatprep.subr.mxu0 0.0
    %121 = vmatpush2.msra.mxu0 0.0
    %122 = vmatprep.subr.mxu0 0.0
    %123 = vmatpush2.msra.mxu0 0.0
    %124 = vmatprep.subr.mxu0 0.0
    %125 = vmatpush2.msra.mxu0 0.0
    %126 = vmatprep.subr.mxu0 0.0
    %127 = vmatpush2.msra.mxu0 0.0
    %128 = vmatprep.mubr.f32.mxu0 0.0
    %129 = vmatmul.mubr.f32.gmra.mxu0 %v62
    %v130 = vpop.f32.mrf.mxu0
    %v131 = vadd.f32 0.0, %v130
    %v132 = vpop.f32.mrf.mxu0
    %133 = vdwg.mxu0
    %v134 = vld [vmem:[#allocation5] sm:$0xff]
    %v135 = vlaneseq
    %v136 = vshrl.u32 %v135, 7
    %v137 = vsub.s32 0, %v136
    %v138 = vrot.slane %v55, %v137
    %v139 = vmul.f32 %v134, %v138
    %v140 = vadd.f32 %v139, %v131
    %v141 = vlaneseq
    %v142 = vshrl.u32 %v141, 7
    %v143 = vsub.s32 0, %v142
    %v144 = vrot.slane %v56, %v143
    %v145 = vadd.f32 %v140, %v144
    %v146 = vtanh.pop %v145
    %vm147 = vcmask 261120
    %148 = vst.msk [vmem:[#allocation8] sm:$0xff] %vm147, %v146
    // Predicated region
    $region30: #{tpu_custom_call.1} parent=1 // pred_check
      _
    $region31: #{tpu_custom_call.1} parent=1 // pred_check_branch
      %150 = sbr.rel (0) target = $region33
    $region32: #{tpu_custom_call.1} parent=1 // pred_region
      %s152 = ssub.s32 128, 128
      %153 = vsyncadd [#allocation4], %s152
      %s155 = sshll.u32 [#allocation8], 4
      %s156 = int_to_ptr.vmem [resolvable:$true] %s155
      %158 = dma.vmem_to_hbm [thread:$0]  %s156, 128, %s4, [#allocation4]
    $region33: #{tpu_custom_call.1} parent=1 // pred_fallthru
      _
    // Predicated region
    $region34: #{tpu_custom_call.1} parent=1 // pred_check
      _
    $region35: #{tpu_custom_call.1} parent=1 // pred_check_branch
      %160 = sbr.rel (0) target = $region37
    $region36: #{tpu_custom_call.1} parent=1 // pred_region
      %161 = dma.done [#allocation4], 128
    $region37: #{tpu_custom_call.1} parent=1 // pred_fallthru
      _
    %162 = vsyncpa [#allocation3], 1
    %163 = vsyncpa [#allocation6], 1
    %164 = vsyncpa [#allocation4], 1

</llo_original>
